<compile_context>
chip_gen: v7x
topology: tpu7x:2x2x1
jax: 0.10.0
libtpu: 0.0.40
codegen_flags: <defaults>
</compile_context>

<pallas_src>
import functools
import math

import jax
import jax.numpy as jnp
from jax.experimental import pallas as pl
from jax.experimental.pallas import tpu as pltpu


def _mh_rmsnorm_kernel(x_ref, m_ref, mg_ref, o_ref, *, eps):
    """One row-tile of multi-head RMSNorm.

    x_ref : (Rb, C)  input row tile
    m_ref : (C, H)   f32 per-head block-indicator (segment-reduce matrix)
    mg_ref: (H, C)   f32 expand matrix; row h holds gamma[h]*sqrt(D) on head h's cols
    o_ref : (Rb, C)  output tile
    """
    x = x_ref[...].astype(jnp.float32)
    # Per-head sum of squares via MXU segment-reduce: (Rb, C) @ (C, H) -> (Rb, H).
    ss = jnp.dot(x * x, m_ref[...],
                 preferred_element_type=jnp.float32,
                 precision=jax.lax.Precision.HIGHEST)
    # 1 / max(||x||, eps) == rsqrt(max(sumsq, eps^2))  (F.normalize clamp) -> EUP.
    inv = jax.lax.rsqrt(jnp.maximum(ss, eps * eps))
    # Expand back to (Rb, C); gamma * sqrt(D) is fused into the expand matrix.
    scale = jnp.dot(inv, mg_ref[...],
                    preferred_element_type=jnp.float32,
                    precision=jax.lax.Precision.HIGHEST)
    o_ref[...] = (x * scale).astype(o_ref.dtype)


def multi_head_rms_norm(x: jax.Array, gamma: jax.Array,
                        *, eps: float = 1e-12,
                        max_tile_bytes: int = 2 << 20) -> jax.Array:
    """x: (..., heads, dim); gamma: (heads, dim) -> same shape/dtype as x."""
    *lead, H, D = x.shape
    assert gamma.shape == (H, D), (gamma.shape, (H, D))
    C = H * D
    R = math.prod(lead) if lead else 1

    x2 = x.reshape(R, C)                                       # contiguous -> free

    # Keep the channel axis a multiple of 128 so the output path is lane-dense
    # (unmasked vst).  Typical configs (C = 128, 4096, ...) skip this branch.
    C_pad = ((C + 127) // 128) * 128
    if C_pad != C:
        x2 = jnp.pad(x2, ((0, 0), (0, C_pad - C)))

    # Constant matrices for the MXU segment-reduce / expand.
    col_head = jnp.arange(C_pad, dtype=jnp.int32) // D         # head id per column
    head_ids = jnp.arange(H, dtype=jnp.int32)
    M = (col_head[:, None] == head_ids[None, :]).astype(jnp.float32)   # (C_pad, H)
    g_flat = (gamma.astype(jnp.float32) * math.sqrt(D)).reshape(C)
    if C_pad != C:
        g_flat = jnp.pad(g_flat, (0, C_pad - C))
    Mg = M.T * g_flat[None, :]                                          # (H, C_pad)

    # --- Row-tile selection -------------------------------------------------
    itemsize = jnp.dtype(x.dtype).itemsize
    bytes_per_row = C_pad * itemsize
    rb = max(8, (max_tile_bytes // bytes_per_row) // 8 * 8)    # ~2 MiB per copy

    if rb >= R:
        if R >= 16:
            # Split into >=2 tiles so both v7x TensorCores get work.
            Rb = ((-(-R // 2)) + 7) // 8 * 8
        else:
            Rb = R                     # full extent: always a legal block shape
    else:
        Rb = rb
        ntiles = -(-R // Rb)
        if ntiles % 2 == 1:
            # Nudge toward an even grid (2-TC load balance on v7x).
            rb2 = ((-(-R // (ntiles + 1))) + 7) // 8 * 8
            if rb2 >= 8:
                Rb = rb2
    grid = (pl.cdiv(R, Rb),)

    kernel = functools.partial(_mh_rmsnorm_kernel, eps=eps)

    out = pl.pallas_call(
        kernel,
        out_shape=jax.ShapeDtypeStruct((R, C_pad), x.dtype),
        grid_spec=pltpu.PrefetchScalarGridSpec(
            num_scalar_prefetch=0,
            grid=grid,
            in_specs=[
                pl.BlockSpec((Rb, C_pad), lambda i: (i, 0)),   # streamed row tile
                pl.BlockSpec((C_pad, H), lambda i: (0, 0)),    # M : VMEM-resident
                pl.BlockSpec((H, C_pad), lambda i: (0, 0)),    # Mg: VMEM-resident
            ],
            out_specs=pl.BlockSpec((Rb, C_pad), lambda i: (i, 0)),
        ),
        compiler_params=pltpu.CompilerParams(
            dimension_semantics=("parallel",),                 # shard rows across TCs
            vmem_limit_bytes=48 << 20,                         # fits v7x 64 MiB VMEM
        ),
    )(x2, M, Mg)

    if C_pad != C:
        out = out[:, :C]
    return out.reshape(x.shape)


def _reference(x, gamma):
    scale = math.sqrt(x.shape[-1])
    xf = x.astype(jnp.float32)
    l2 = jnp.maximum(jnp.sqrt(jnp.sum(xf * xf, axis=-1, keepdims=True)), 1e-12)
    return ((xf / l2) * gamma * scale).astype(x.dtype)


if __name__ == "__main__":
    key = jax.random.PRNGKey(0)
    # x layout matches the module's gamma (heads, dim) broadcast: (B, N, H, D).
    B, N, H, D = 2, 8, 4, 32

    kx, kg = jax.random.split(key)
    x = jax.random.normal(kx, (B, N, H, D), dtype=jnp.float32)
    # Module init is gamma = ones(heads, dim); perturb deterministically so the
    # gamma multiply is actually exercised.
    gamma = jnp.ones((H, D), dtype=jnp.float32) + 0.01 * jax.random.normal(
        kg, (H, D), dtype=jnp.float32
    )

    out = multi_head_rms_norm(x, gamma)
    jax.block_until_ready(out)

    ref = _reference(x, gamma)
    assert out.shape == (B, N, H, D)
    assert jnp.allclose(out, ref, atol=1e-5, rtol=1e-5), "mismatch vs reference"

    print("KERNEL_OK")
</pallas_src>

<mosaic_0001>
module attributes {stable_mosaic.version = 11 : i64} {
  func.func @_mh_rmsnorm_kernel(%arg0: i32, %arg1: memref<8x128xf32, #tpu.memory_space<vmem>>, %arg2: memref<128x4xf32, #tpu.memory_space<vmem>>, %arg3: memref<4x128xf32, #tpu.memory_space<vmem>>, %arg4: memref<8x128xf32, #tpu.memory_space<vmem>>) attributes {dimension_semantics = [#tpu.dimension_semantics<parallel>], iteration_bounds = array<i64: 2>, scalar_prefetch = 0 : i64, scratch_operands = 0 : i64, tpu.core_type = #tpu.core_type<tc>, window_params = [{transform_indices = @transform_0, window_bounds = array<i64: 8, 128>}, {pipeline_mode = #tpu.pipeline_mode<synchronous>, transform_indices = @transform_1, window_bounds = array<i64: 128, 4>}, {pipeline_mode = #tpu.pipeline_mode<synchronous>, transform_indices = @transform_2, window_bounds = array<i64: 4, 128>}, {transform_indices = @transform_3, window_bounds = array<i64: 8, 128>}]} {
    %c0 = arith.constant 0 : index
    %c0_0 = arith.constant 0 : index
    %0 = vector.load %arg1[%c0, %c0_0] : memref<8x128xf32, #tpu.memory_space<vmem>>, vector<8x128xf32>
    %1 = arith.mulf %0, %0 : vector<8x128xf32>
    %c0_1 = arith.constant 0 : index
    %c0_2 = arith.constant 0 : index
    %2 = vector.load %arg2[%c0_1, %c0_2] : memref<128x4xf32, #tpu.memory_space<vmem>>, vector<128x4xf32>
    %cst = arith.constant dense<0.000000e+00> : vector<8x4xf32>
    %3 = tpu.matmul %1, %2, %cst {dimension_numbers = #tpu.dot_dimension_numbers<[1], [0], [0], [1], [0, 0, 1, 1], [], []>, precision = #tpu.contract_precision<fp32>} : vector<8x128xf32>, vector<128x4xf32>, vector<8x4xf32> -> vector<8x4xf32>
    %cst_3 = arith.constant 1.000000e-24 : f32
    %4 = vector.broadcast %cst_3 : f32 to vector<8x4xf32>
    %5 = arith.maximumf %3, %4 : vector<8x4xf32>
    %6 = math.rsqrt %5 : vector<8x4xf32>
    %c0_4 = arith.constant 0 : index
    %c0_5 = arith.constant 0 : index
    %7 = vector.load %arg3[%c0_4, %c0_5] : memref<4x128xf32, #tpu.memory_space<vmem>>, vector<4x128xf32>
    %cst_6 = arith.constant dense<0.000000e+00> : vector<8x128xf32>
    %8 = tpu.matmul %6, %7, %cst_6 {dimension_numbers = #tpu.dot_dimension_numbers<[1], [0], [0], [1], [0, 0, 1, 1], [], []>, precision = #tpu.contract_precision<fp32>} : vector<8x4xf32>, vector<4x128xf32>, vector<8x128xf32> -> vector<8x128xf32>
    %9 = arith.mulf %0, %8 : vector<8x128xf32>
    %c0_7 = arith.constant 0 : index
    %c0_8 = arith.constant 0 : index
    %10 = vector.load %arg4[%c0_7, %c0_8] : memref<8x128xf32, #tpu.memory_space<vmem>>, vector<8x128xf32>
    tpu.vector_store %arg4[%c0_7, %c0_8], %9 {strides = array<i32>} : memref<8x128xf32, #tpu.memory_space<vmem>>, vector<8x128xf32>,
    return
  }
  func.func @transform_0(%arg0: i32) -> (i32, i32) {
    %c0_i32 = arith.constant 0 : i32
    %c0_i32_0 = arith.constant 0 : i32
    return %arg0, %c0_i32 : i32, i32
  }
  func.func @transform_1(%arg0: i32) -> (i32, i32) {
    %c0_i32 = arith.constant 0 : i32
    %c0_i32_0 = arith.constant 0 : i32
    %c0_i32_1 = arith.constant 0 : i32
    return %c0_i32, %c0_i32_0 : i32, i32
  }
  func.func @transform_2(%arg0: i32) -> (i32, i32) {
    %c0_i32 = arith.constant 0 : i32
    %c0_i32_0 = arith.constant 0 : i32
    %c0_i32_1 = arith.constant 0 : i32
    return %c0_i32, %c0_i32_0 : i32, i32
  }
  func.func @transform_3(%arg0: i32) -> (i32, i32) {
    %c0_i32 = arith.constant 0 : i32
    %c0_i32_0 = arith.constant 0 : i32
    return %arg0, %c0_i32 : i32, i32
  }
}

</mosaic_0001>

<llo_original>
// kernel: tpu_custom_call.1
$region0: #{tpu_custom_call.1}
  #allocation0 [shape = 'u32[]', space=smem, size = 0x4, offset = 0x4, fixed_abs, tag = 'smem constant byte address 0x4 - core index']
  #allocation1 [shape = 'u32[144,128]{1,0:T(1,128)}', space=vmem, size = 0x12000, scoped, tag = 'internal scratch']
  %s0 = inlined_call_operand.vmem [shape: f32[16,128], index: 0, kind: input, shape index: {}]
  %s1 = inlined_call_operand.vmem [shape: f32[128,4], index: 1, kind: input, shape index: {}]
  %s2 = inlined_call_operand.vmem [shape: f32[4,128], index: 2, kind: input, shape index: {}]
  %s3 = inlined_call_operand.hbm [shape: f32[16,128], index: 3, kind: output, shape index: {}]
  %s4 = sld [smem:[#allocation0]]
  $region45: #{tpu_custom_call.1} parent=0
    _
  %s6 = ssub.s32 1, %s4
  %s7 = scalar_select 0, %s6, %s4
  $region1: #{tpu_custom_call.1} parent=0
    #allocation2 [shape = 'u8[8192]{0}', space=vmem, size = 0x2000, scoped, tag = 'output window, operand 0']
    #allocation3 [shape = 's32[2]{0}', space=sflag, size = 0x8, scoped, tag = 'scoped memory for tpu_custom_call.1']
    %8 = vsyncpa [#allocation3], 0
    %s9 = scalar_lea.sflag [#allocation3], 1
    %10 = vsyncpa %s9, 0
    loop: start=0, step=1, limit=4
    $region2: #{tpu_custom_call.1} parent=1 // loop_pre_header
      _
    $region3: #{tpu_custom_call.1} parent=1 // loop_header
      %s12 = sphi 0, %s16
      %p13 = scmp.ge.s32.totalorder %s12, 4
      %s22 = sphi 0, %s24
      %s25 = sphi 0, %s22
      %s26 = sphi 0, %s25
      %s42 = sphi 0, %s26
      %s46 = sphi 0, %s46
      %s48 = sphi 0, %s46
      %s49 = sphi 0, %s48
      %s63 = sphi 0, %s49
      %s67 = sphi 0, %s67
      %s69 = sphi 0, %s67
      %s70 = sphi 0, %s69
      %s84 = sphi 0, %s70
      %s90 = sphi 0, %s92
      %s93 = sphi 0, %s90
      %s94 = sphi 0, %s93
      %s110 = sphi 0, %s94
    $region4: #{tpu_custom_call.1} parent=1 // loop_header_branch
      %15 = sbr.rel (%p13) target = $region8
    $region5: #{tpu_custom_call.1} parent=1 // loop_body
      %s17 = ssub.s32 %s12, 1
      %s18 = ssub.s32 %s12, 2
      %s19 = sadd.s32 %s12, 1
      %s20 = ssub.s32 %s12, %s19
      %p21 = scmp.eq.s32.totalorder %s20, 0
      %s23 = sadd.s32 %s22, 1
      %s24 = scalar_select %p21, %s22, %s23
      %p27 = pneg %p21
      %p28 = scmp.eq.s32.totalorder %s12, 1
      %p29 = por %p27, %p28
      %p30 = scmp.ne.s32.totalorder %s22, %s25
      %p31 = scmp.eq.s32.totalorder %s12, 0
      %p32 = por %p30, %p31
      %p33 = scmp.ne.s32.totalorder %s22, %s25
      %p34 = scmp.eq.s32.totalorder %s17, 1
      %p35 = por %p33, %p34
      %p36 = scmp.ne.s32.totalorder %s25, %s26
      %p37 = scmp.eq.s32.totalorder %s17, 0
      %p38 = por %p36, %p37
      %p39 = scmp.ne.s32.totalorder %s25, %s26
      %p40 = scmp.eq.s32.totalorder %s18, 1
      %p41 = por %p39, %p40
      %p43 = scmp.ne.s32.totalorder %s26, %s42
      %p44 = scmp.eq.s32.totalorder %s18, 0
      %p45 = por %p43, %p44
      %s47 = sadd.s32 %s46, 1
      %p50 = scmp.eq.s32.totalorder %s12, 1
      %p51 = scmp.ne.s32.totalorder %s46, %s48
      %p52 = scmp.eq.s32.totalorder %s12, 0
      %p53 = por %p51, %p52
      %p54 = scmp.ne.s32.totalorder %s46, %s48
      %p55 = scmp.eq.s32.totalorder %s17, 1
      %p56 = por %p54, %p55
      %p57 = scmp.ne.s32.totalorder %s48, %s49
      %p58 = scmp.eq.s32.totalorder %s17, 0
      %p59 = por %p57, %p58
      %p60 = scmp.ne.s32.totalorder %s48, %s49
      %p61 = scmp.eq.s32.totalorder %s18, 1
      %p62 = por %p60, %p61
      %p64 = scmp.ne.s32.totalorder %s49, %s63
      %p65 = scmp.eq.s32.totalorder %s18, 0
      %p66 = por %p64, %p65
      %s68 = sadd.s32 %s67, 1
      %p71 = scmp.eq.s32.totalorder %s12, 1
      %p72 = scmp.ne.s32.totalorder %s67, %s69
      %p73 = scmp.eq.s32.totalorder %s12, 0
      %p74 = por %p72, %p73
      %p75 = scmp.ne.s32.totalorder %s67, %s69
      %p76 = scmp.eq.s32.totalorder %s17, 1
      %p77 = por %p75, %p76
      %p78 = scmp.ne.s32.totalorder %s69, %s70
      %p79 = scmp.eq.s32.totalorder %s17, 0
      %p80 = por %p78, %p79
      %p81 = scmp.ne.s32.totalorder %s69, %s70
      %p82 = scmp.eq.s32.totalorder %s18, 1
      %p83 = por %p81, %p82
      %p85 = scmp.ne.s32.totalorder %s70, %s84
      %p86 = scmp.eq.s32.totalorder %s18, 0
      %p87 = por %p85, %p86
      %s88 = ssub.s32 %s12, %s19
      %p89 = scmp.eq.s32.totalorder %s88, 0
      %s91 = sadd.s32 %s90, 1
      %s92 = scalar_select %p89, %s90, %s91
      %p95 = pneg %p89
      %p96 = scmp.eq.s32.totalorder %s12, 1
      %p97 = por %p95, %p96
      %p98 = scmp.ne.s32.totalorder %s90, %s93
      %p99 = scmp.eq.s32.totalorder %s12, 0
      %p100 = por %p98, %p99
      %p101 = scmp.ne.s32.totalorder %s90, %s93
      %p102 = scmp.eq.s32.totalorder %s17, 1
      %p103 = por %p101, %p102
      %p104 = scmp.ne.s32.totalorder %s93, %s94
      %p105 = scmp.eq.s32.totalorder %s17, 0
      %p106 = por %p104, %p105
      %p107 = scmp.ne.s32.totalorder %s93, %s94
      %p108 = scmp.eq.s32.totalorder %s18, 1
      %p109 = por %p107, %p108
      %p111 = scmp.ne.s32.totalorder %s94, %s110
      %p112 = scmp.eq.s32.totalorder %s18, 0
      %p113 = por %p111, %p112
      %p114 = scmp.le.s32.totalorder 1, %s12
      %p115 = scmp.lt.s32.totalorder %s12, 3
      %p116 = pnand %p114, %p115
      %p117 = pneg %p116
      // Predicated region
      $region9: #{tpu_custom_call.1} parent=5 // pred_check
        _
      $region10: #{tpu_custom_call.1} parent=5 // pred_check_branch
        %119 = sbr.rel (%p116) target = $region12
      $region11: #{tpu_custom_call.1} parent=5 // pred_region
        %s120 = ssub.s32 %s12, 1
        // Predicated region
        $region13: #{tpu_custom_call.1} parent=11 // pred_check
          %p121 = pneg %p59
        $region14: #{tpu_custom_call.1} parent=11 // pred_check_branch
          %123 = sbr.rel (%p121) target = $region16
        $region15: #{tpu_custom_call.1} parent=11 // pred_region
          _
        $region16: #{tpu_custom_call.1} parent=11 // pred_fallthru
          _
        // Predicated region
        $region17: #{tpu_custom_call.1} parent=11 // pred_check
          %p124 = pneg %p80
        $region18: #{tpu_custom_call.1} parent=11 // pred_check_branch
          %126 = sbr.rel (%p124) target = $region20
        $region19: #{tpu_custom_call.1} parent=11 // pred_region
          _
        $region20: #{tpu_custom_call.1} parent=11 // pred_fallthru
          _
      $region12: #{tpu_custom_call.1} parent=5 // pred_fallthru
        _
      %p127 = scmp.lt.s32.totalorder %s12, 2
      // Predicated region
      $region21: #{tpu_custom_call.1} parent=5 // pred_check
        %p128 = pneg %p127
      $region22: #{tpu_custom_call.1} parent=5 // pred_check_branch
        %130 = sbr.rel (%p128) target = $region24
      $region23: #{tpu_custom_call.1} parent=5 // pred_region
        // Predicated region
        $region25: #{tpu_custom_call.1} parent=23 // pred_check
          %p131 = pneg %p32
        $region26: #{tpu_custom_call.1} parent=23 // pred_check_branch
          %133 = sbr.rel (%p131) target = $region28
        $region27: #{tpu_custom_call.1} parent=23 // pred_region
          %p134 = scmp.lt.s32.totalorder %s12, 1
          %s135 = scalar_select %p134, %s12, 1
          %s136 = smul.addr %s135, 8
          %s137 = scalar_lea.vmem %s0, %s136
        $region28: #{tpu_custom_call.1} parent=23 // pred_fallthru
          _
      $region24: #{tpu_custom_call.1} parent=5 // pred_fallthru
        _
      %p138 = scmp.le.s32.totalorder 1, %s12
      %p139 = scmp.lt.s32.totalorder %s12, 3
      %p140 = pnand %p138, %p139
      %p141 = pneg %p140
      // Predicated region
      $region29: #{tpu_custom_call.1} parent=5 // pred_check
        _
      $region30: #{tpu_custom_call.1} parent=5 // pred_check_branch
        %143 = sbr.rel (%p140) target = $region32
      $region31: #{tpu_custom_call.1} parent=5 // pred_region
        %s144 = ssub.s32 %s12, 1
        %p145 = scmp.lt.s32.totalorder %s17, 1
        %s146 = scalar_select %p145, %s17, 1
        %s147 = smul.addr %s146, 8
        %s148 = scalar_lea.vmem %s0, %s147
        %p149 = pneg %p38
        %p150 = pneg %p35
        %p151 = pneg %p59
        %p152 = pneg %p56
        %p153 = pneg %p80
        %p154 = pneg %p77
        %p155 = pneg %p106
        %p156 = pneg %p103
        %s157 = sand.u32 %s93, 1
        %s158 = scalar_lea.sflag [#allocation3], %s157
        %s159 = sand.u32 %s93, 1
        %s160 = smul.addr %s159, 8
        %s161 = scalar_lea.vmem [#allocation2], %s160
        %p162 = scmp.lt.s32.totalorder %s17, 1
        %s163 = scalar_select %p162, %s17, 1
        %s164 = smul.addr %s163, 8
        %s165 = scalar_lea.vmem %s0, %s164
        %v166 = vld [vmem:[%s165] sm:$0xff]
        %v167 = vmul.f32 %v166, %v166
        %v168 = vld [vmem:[%s1] sm:$0xff]
        %v169 = vld [vmem:[%s1 + $0x8] sm:$0xff]
        %v170 = vld [vmem:[%s1 + $0x10] sm:$0xff]
        %v171 = vld [vmem:[%s1 + $0x18] sm:$0xff]
        %v172 = vld [vmem:[%s1 + $0x20] sm:$0xff]
        %v173 = vld [vmem:[%s1 + $0x28] sm:$0xff]
        %v174 = vld [vmem:[%s1 + $0x30] sm:$0xff]
        %v175 = vld [vmem:[%s1 + $0x38] sm:$0xff]
        %v176 = vld [vmem:[%s1 + $0x40] sm:$0xff]
        %v177 = vld [vmem:[%s1 + $0x48] sm:$0xff]
        %v178 = vld [vmem:[%s1 + $0x50] sm:$0xff]
        %v179 = vld [vmem:[%s1 + $0x58] sm:$0xff]
        %v180 = vld [vmem:[%s1 + $0x60] sm:$0xff]
        %v181 = vld [vmem:[%s1 + $0x68] sm:$0xff]
        %v182 = vld [vmem:[%s1 + $0x70] sm:$0xff]
        %v183 = vld [vmem:[%s1 + $0x78] sm:$0xff]
        %184 = vmatprep.subr.mxu0 0.0
        %v185 = vand.u32 %v168, 4294901760
        %186 = vmatpush1.msra.mxu0 %v185
        %187 = vmatprep.subr.mxu0 0.0
        %v188 = vand.u32 %v169, 4294901760
        %189 = vmatpush1.msra.mxu0 %v188
        %190 = vmatprep.subr.mxu0 0.0
        %v191 = vand.u32 %v170, 4294901760
        %192 = vmatpush1.msra.mxu0 %v191
        %193 = vmatprep.subr.mxu0 0.0
        %v194 = vand.u32 %v171, 4294901760
        %195 = vmatpush1.msra.mxu0 %v194
        %196 = vmatprep.subr.mxu0 0.0
        %v197 = vand.u32 %v172, 4294901760
        %198 = vmatpush1.msra.mxu0 %v197
        %199 = vmatprep.subr.mxu0 0.0
        %v200 = vand.u32 %v173, 4294901760
        %201 = vmatpush1.msra.mxu0 %v200
        %202 = vmatprep.subr.mxu0 0.0
        %v203 = vand.u32 %v174, 4294901760
        %204 = vmatpush1.msra.mxu0 %v203
        %205 = vmatprep.subr.mxu0 0.0
        %v206 = vand.u32 %v175, 4294901760
        %207 = vmatpush1.msra.mxu0 %v206
        %208 = vmatprep.subr.mxu0 0.0
        %v209 = vand.u32 %v176, 4294901760
        %210 = vmatpush1.msra.mxu0 %v209
        %211 = vmatprep.subr.mxu0 0.0
        %v212 = vand.u32 %v177, 4294901760
        %213 = vmatpush1.msra.mxu0 %v212
        %214 = vmatprep.subr.mxu0 0.0
        %v215 = vand.u32 %v178, 4294901760
        %216 = vmatpush1.msra.mxu0 %v215
        %217 = vmatprep.subr.mxu0 0.0
        %v218 = vand.u32 %v179, 4294901760
        %219 = vmatpush1.msra.mxu0 %v218
        %220 = vmatprep.subr.mxu0 0.0
        %v221 = vand.u32 %v180, 4294901760
        %222 = vmatpush1.msra.mxu0 %v221
        %223 = vmatprep.subr.mxu0 0.0
        %v224 = vand.u32 %v181, 4294901760
        %225 = vmatpush1.msra.mxu0 %v224
        %226 = vmatprep.subr.mxu0 0.0
        %v227 = vand.u32 %v182, 4294901760
        %228 = vmatpush1.msra.mxu0 %v227
        %229 = vmatprep.subr.mxu0 0.0
        %v230 = vand.u32 %v183, 4294901760
        %231 = vmatpush1.msra.mxu0 %v230
        %232 = vmatprep.subr.mxu0 0.0
        %233 = vmatpush1.msra.mxu0 0.0
        %234 = vmatprep.subr.mxu0 0.0
        %235 = vmatpush1.msra.mxu0 0.0
        %236 = vmatprep.subr.mxu0 0.0
        %237 = vmatpush1.msra.mxu0 0.0
        %238 = vmatprep.subr.mxu0 0.0
        %239 = vmatpush1.msra.mxu0 0.0
        %240 = vmatprep.subr.mxu0 0.0
        %241 = vmatpush1.msra.mxu0 0.0
        %242 = vmatprep.subr.mxu0 0.0
        %243 = vmatpush1.msra.mxu0 0.0
        %244 = vmatprep.subr.mxu0 0.0
        %245 = vmatpush1.msra.mxu0 0.0
        %246 = vmatprep.subr.mxu0 0.0
        %247 = vmatpush1.msra.mxu0 0.0
        %248 = vmatprep.subr.mxu0 0.0
        %249 = vmatpush1.msra.mxu0 0.0
        %250 = vmatprep.subr.mxu0 0.0
        %251 = vmatpush1.msra.mxu0 0.0
        %252 = vmatprep.subr.mxu0 0.0
        %253 = vmatpush1.msra.mxu0 0.0
        %254 = vmatprep.subr.mxu0 0.0
        %255 = vmatpush1.msra.mxu0 0.0
        %256 = vmatprep.subr.mxu0 0.0
        %257 = vmatpush1.msra.mxu0 0.0
        %258 = vmatprep.subr.mxu0 0.0
        %259 = vmatpush1.msra.mxu0 0.0
        %260 = vmatprep.subr.mxu0 0.0
        %261 = vmatpush1.msra.mxu0 0.0
        %262 = vmatprep.subr.mxu0 0.0
        %263 = vmatpush1.msra.mxu0 0.0
        %264 = vmatprep.mubr.f32.mxu0 0.0
        %v265 = vand.u32 %v167, 4294901760
        %v266 = vsub.f32 %v167, %v265
        %v267 = vand.u32 %v266, 4294901760
        %v268 = vsub.f32 %v266, %v267
        %v269 = vand.u32 %v268, 4294901760
        %270 = vmatmul.mubr.f32.gmra.mrb[0].mxu0 %v269
        %v271 = vpop.f32.mrb[0].mxu0
        %v272 = vadd.f32 0.0, %v271
        %v273 = vpop.f32.mrb[0].mxu0
        %274 = vdwg.mxu0
        %275 = vmatprep.subr.mxu0 0.0
        %v276 = vand.u32 %v168, 4294901760
        %v277 = vsub.f32 %v168, %v276
        %v278 = vand.u32 %v277, 4294901760
        %v279 = vsub.f32 %v277, %v278
        %v280 = vand.u32 %v279, 4294901760
        %281 = vmatpush1.msra.mxu0 %v280
        %282 = vmatprep.subr.mxu0 0.0
        %v283 = vand.u32 %v169, 4294901760
        %v284 = vsub.f32 %v169, %v283
        %v285 = vand.u32 %v284, 4294901760
        %v286 = vsub.f32 %v284, %v285
        %v287 = vand.u32 %v286, 4294901760
        %288 = vmatpush1.msra.mxu0 %v287
        %289 = vmatprep.subr.mxu0 0.0
        %v290 = vand.u32 %v170, 4294901760
        %v291 = vsub.f32 %v170, %v290
        %v292 = vand.u32 %v291, 4294901760
        %v293 = vsub.f32 %v291, %v292
        %v294 = vand.u32 %v293, 4294901760
        %295 = vmatpush1.msra.mxu0 %v294
        %296 = vmatprep.subr.mxu0 0.0
        %v297 = vand.u32 %v171, 4294901760
        %v298 = vsub.f32 %v171, %v297
        %v299 = vand.u32 %v298, 4294901760
        %v300 = vsub.f32 %v298, %v299
        %v301 = vand.u32 %v300, 4294901760
        %302 = vmatpush1.msra.mxu0 %v301
        %303 = vmatprep.subr.mxu0 0.0
        %v304 = vand.u32 %v172, 4294901760
        %v305 = vsub.f32 %v172, %v304
        %v306 = vand.u32 %v305, 4294901760
        %v307 = vsub.f32 %v305, %v306
        %v308 = vand.u32 %v307, 4294901760
        %309 = vmatpush1.msra.mxu0 %v308
        %310 = vmatprep.subr.mxu0 0.0
        %v311 = vand.u32 %v173, 4294901760
        %v312 = vsub.f32 %v173, %v311
        %v313 = vand.u32 %v312, 4294901760
        %v314 = vsub.f32 %v312, %v313
        %v315 = vand.u32 %v314, 4294901760
        %316 = vmatpush1.msra.mxu0 %v315
        %317 = vmatprep.subr.mxu0 0.0
        %v318 = vand.u32 %v174, 4294901760
        %v319 = vsub.f32 %v174, %v318
        %v320 = vand.u32 %v319, 4294901760
        %v321 = vsub.f32 %v319, %v320
        %v322 = vand.u32 %v321, 4294901760
        %323 = vmatpush1.msra.mxu0 %v322
        %324 = vmatprep.subr.mxu0 0.0
        %v325 = vand.u32 %v175, 4294901760
        %v326 = vsub.f32 %v175, %v325
        %v327 = vand.u32 %v326, 4294901760
        %v328 = vsub.f32 %v326, %v327
        %v329 = vand.u32 %v328, 4294901760
        %330 = vmatpush1.msra.mxu0 %v329
        %331 = vmatprep.subr.mxu0 0.0
        %v332 = vand.u32 %v176, 4294901760
        %v333 = vsub.f32 %v176, %v332
        %v334 = vand.u32 %v333, 4294901760
        %v335 = vsub.f32 %v333, %v334
        %v336 = vand.u32 %v335, 4294901760
        %337 = vmatpush1.msra.mxu0 %v336
        %338 = vmatprep.subr.mxu0 0.0
        %v339 = vand.u32 %v177, 4294901760
        %v340 = vsub.f32 %v177, %v339
        %v341 = vand.u32 %v340, 4294901760
        %v342 = vsub.f32 %v340, %v341
        %v343 = vand.u32 %v342, 4294901760
        %344 = vmatpush1.msra.mxu0 %v343
        %345 = vmatprep.subr.mxu0 0.0
        %v346 = vand.u32 %v178, 4294901760
        %v347 = vsub.f32 %v178, %v346
        %v348 = vand.u32 %v347, 4294901760
        %v349 = vsub.f32 %v347, %v348
        %v350 = vand.u32 %v349, 4294901760
        %351 = vmatpush1.msra.mxu0 %v350
        %352 = vmatprep.subr.mxu0 0.0
        %v353 = vand.u32 %v179, 4294901760
        %v354 = vsub.f32 %v179, %v353
        %v355 = vand.u32 %v354, 4294901760
        %v356 = vsub.f32 %v354, %v355
        %v357 = vand.u32 %v356, 4294901760
        %358 = vmatpush1.msra.mxu0 %v357
        %359 = vmatprep.subr.mxu0 0.0
        %v360 = vand.u32 %v180, 4294901760
        %v361 = vsub.f32 %v180, %v360
        %v362 = vand.u32 %v361, 4294901760
        %v363 = vsub.f32 %v361, %v362
        %v364 = vand.u32 %v363, 4294901760
        %365 = vmatpush1.msra.mxu0 %v364
        %366 = vmatprep.subr.mxu0 0.0
        %v367 = vand.u32 %v181, 4294901760
        %v368 = vsub.f32 %v181, %v367
        %v369 = vand.u32 %v368, 4294901760
        %v370 = vsub.f32 %v368, %v369
        %v371 = vand.u32 %v370, 4294901760
        %372 = vmatpush1.msra.mxu0 %v371
        %373 = vmatprep.subr.mxu0 0.0
        %v374 = vand.u32 %v182, 4294901760
        %v375 = vsub.f32 %v182, %v374
        %v376 = vand.u32 %v375, 4294901760
        %v377 = vsub.f32 %v375, %v376
        %v378 = vand.u32 %v377, 4294901760
        %379 = vmatpush1.msra.mxu0 %v378
        %380 = vmatprep.subr.mxu0 0.0
        %v381 = vand.u32 %v183, 4294901760
        %v382 = vsub.f32 %v183, %v381
        %v383 = vand.u32 %v382, 4294901760
        %v384 = vsub.f32 %v382, %v383
        %v385 = vand.u32 %v384, 4294901760
        %386 = vmatpush1.msra.mxu0 %v385
        %387 = vmatprep.subr.mxu0 0.0
        %388 = vmatpush1.msra.mxu0 0.0
        %389 = vmatprep.subr.mxu0 0.0
        %390 = vmatpush1.msra.mxu0 0.0
        %391 = vmatprep.subr.mxu0 0.0
        %392 = vmatpush1.msra.mxu0 0.0
        %393 = vmatprep.subr.mxu0 0.0
        %394 = vmatpush1.msra.mxu0 0.0
        %395 = vmatprep.subr.mxu0 0.0
        %396 = vmatpush1.msra.mxu0 0.0
        %397 = vmatprep.subr.mxu0 0.0
        %398 = vmatpush1.msra.mxu0 0.0
        %399 = vmatprep.subr.mxu0 0.0
        %400 = vmatpush1.msra.mxu0 0.0
        %401 = vmatprep.subr.mxu0 0.0
        %402 = vmatpush1.msra.mxu0 0.0
        %403 = vmatprep.subr.mxu0 0.0
        %404 = vmatpush1.msra.mxu0 0.0
        %405 = vmatprep.subr.mxu0 0.0
        %406 = vmatpush1.msra.mxu0 0.0
        %407 = vmatprep.subr.mxu0 0.0
        %408 = vmatpush1.msra.mxu0 0.0
        %409 = vmatprep.subr.mxu0 0.0
        %410 = vmatpush1.msra.mxu0 0.0
        %411 = vmatprep.subr.mxu0 0.0
        %412 = vmatpush1.msra.mxu0 0.0
        %413 = vmatprep.subr.mxu0 0.0
        %414 = vmatpush1.msra.mxu0 0.0
        %415 = vmatprep.subr.mxu0 0.0
        %416 = vmatpush1.msra.mxu0 0.0
        %417 = vmatprep.subr.mxu0 0.0
        %418 = vmatpush1.msra.mxu0 0.0
        %419 = vmatprep.mubr.f32.mxu0 0.0
        %v420 = vand.u32 %v167, 4294901760
        %421 = vmatmul.mubr.f32.gmra.mrb[0].mxu0 %v420
        %v422 = vpop.f32.mrb[0].mxu0
        %v423 = vadd.f32 %v272, %v422
        %v424 = vpop.f32.mrb[0].mxu0
        %425 = vdwg.mxu0
        %426 = vmatprep.subr.mxu0 0.0
        %v427 = vand.u32 %v168, 4294901760
        %v428 = vsub.f32 %v168, %v427
        %429 = vmatpush1.msra.mxu0 %v428
        %430 = vmatprep.subr.mxu0 0.0
        %v431 = vand.u32 %v169, 4294901760
        %v432 = vsub.f32 %v169, %v431
        %433 = vmatpush1.msra.mxu0 %v432
        %434 = vmatprep.subr.mxu0 0.0
        %v435 = vand.u32 %v170, 4294901760
        %v436 = vsub.f32 %v170, %v435
        %437 = vmatpush1.msra.mxu0 %v436
        %438 = vmatprep.subr.mxu0 0.0
        %v439 = vand.u32 %v171, 4294901760
        %v440 = vsub.f32 %v171, %v439
        %441 = vmatpush1.msra.mxu0 %v440
        %442 = vmatprep.subr.mxu0 0.0
        %v443 = vand.u32 %v172, 4294901760
        %v444 = vsub.f32 %v172, %v443
        %445 = vmatpush1.msra.mxu0 %v444
        %446 = vmatprep.subr.mxu0 0.0
        %v447 = vand.u32 %v173, 4294901760
        %v448 = vsub.f32 %v173, %v447
        %449 = vmatpush1.msra.mxu0 %v448
        %450 = vmatprep.subr.mxu0 0.0
        %v451 = vand.u32 %v174, 4294901760
        %v452 = vsub.f32 %v174, %v451
        %453 = vmatpush1.msra.mxu0 %v452
        %454 = vmatprep.subr.mxu0 0.0
        %v455 = vand.u32 %v175, 4294901760
        %v456 = vsub.f32 %v175, %v455
        %457 = vmatpush1.msra.mxu0 %v456
        %458 = vmatprep.subr.mxu0 0.0
        %v459 = vand.u32 %v176, 4294901760
        %v460 = vsub.f32 %v176, %v459
        %461 = vmatpush1.msra.mxu0 %v460
        %462 = vmatprep.subr.mxu0 0.0
        %v463 = vand.u32 %v177, 4294901760
        %v464 = vsub.f32 %v177, %v463
        %465 = vmatpush1.msra.mxu0 %v464
        %466 = vmatprep.subr.mxu0 0.0
        %v467 = vand.u32 %v178, 4294901760
        %v468 = vsub.f32 %v178, %v467
        %469 = vmatpush1.msra.mxu0 %v468
        %470 = vmatprep.subr.mxu0 0.0
        %v471 = vand.u32 %v179, 4294901760
        %v472 = vsub.f32 %v179, %v471
        %473 = vmatpush1.msra.mxu0 %v472
        %474 = vmatprep.subr.mxu0 0.0
        %v475 = vand.u32 %v180, 4294901760
        %v476 = vsub.f32 %v180, %v475
        %477 = vmatpush1.msra.mxu0 %v476
        %478 = vmatprep.subr.mxu0 0.0
        %v479 = vand.u32 %v181, 4294901760
        %v480 = vsub.f32 %v181, %v479
        %481 = vmatpush1.msra.mxu0 %v480
        %482 = vmatprep.subr.mxu0 0.0
        %v483 = vand.u32 %v182, 4294901760
        %v484 = vsub.f32 %v182, %v483
        %485 = vmatpush1.msra.mxu0 %v484
        %486 = vmatprep.subr.mxu0 0.0
        %v487 = vand.u32 %v183, 4294901760
        %v488 = vsub.f32 %v183, %v487
        %489 = vmatpush1.msra.mxu0 %v488
        %490 = vmatprep.subr.mxu0 0.0
        %491 = vmatpush1.msra.mxu0 0.0
        %492 = vmatprep.subr.mxu0 0.0
        %493 = vmatpush1.msra.mxu0 0.0
        %494 = vmatprep.subr.mxu0 0.0
        %495 = vmatpush1.msra.mxu0 0.0
        %496 = vmatprep.subr.mxu0 0.0
        %497 = vmatpush1.msra.mxu0 0.0
        %498 = vmatprep.subr.mxu0 0.0
        %499 = vmatpush1.msra.mxu0 0.0
        %500 = vmatprep.subr.mxu0 0.0
        %501 = vmatpush1.msra.mxu0 0.0
        %502 = vmatprep.subr.mxu0 0.0
        %503 = vmatpush1.msra.mxu0 0.0
        %504 = vmatprep.subr.mxu0 0.0
        %505 = vmatpush1.msra.mxu0 0.0
        %506 = vmatprep.subr.mxu0 0.0
        %507 = vmatpush1.msra.mxu0 0.0
        %508 = vmatprep.subr.mxu0 0.0
        %509 = vmatpush1.msra.mxu0 0.0
        %510 = vmatprep.subr.mxu0 0.0
        %511 = vmatpush1.msra.mxu0 0.0
        %512 = vmatprep.subr.mxu0 0.0
        %513 = vmatpush1.msra.mxu0 0.0
        %514 = vmatprep.subr.mxu0 0.0
        %515 = vmatpush1.msra.mxu0 0.0
        %516 = vmatprep.subr.mxu0 0.0
        %517 = vmatpush1.msra.mxu0 0.0
        %518 = vmatprep.subr.mxu0 0.0
        %519 = vmatpush1.msra.mxu0 0.0
        %520 = vmatprep.subr.mxu0 0.0
        %521 = vmatpush1.msra.mxu0 0.0
        %522 = vmatprep.mubr.f32.mxu0 0.0
        %v523 = vand.u32 %v167, 4294901760
        %v524 = vsub.f32 %v167, %v523
        %525 = vmatmul.mubr.f32.gmra.mrb[0].mxu0 %v524
        %v526 = vpop.f32.mrb[0].mxu0
        %v527 = vadd.f32 %v423, %v526
        %v528 = vpop.f32.mrb[0].mxu0
        %529 = vdwg.mxu0
        %530 = vmatprep.subr.mxu0 0.0
        %v531 = vand.u32 %v168, 4294901760
        %532 = vmatpush1.msra.mxu0 %v531
        %533 = vmatprep.subr.mxu0 0.0
        %v534 = vand.u32 %v169, 4294901760
        %535 = vmatpush1.msra.mxu0 %v534
        %536 = vmatprep.subr.mxu0 0.0
        %v537 = vand.u32 %v170, 4294901760
        %538 = vmatpush1.msra.mxu0 %v537
        %539 = vmatprep.subr.mxu0 0.0
        %v540 = vand.u32 %v171, 4294901760
        %541 = vmatpush1.msra.mxu0 %v540
        %542 = vmatprep.subr.mxu0 0.0
        %v543 = vand.u32 %v172, 4294901760
        %544 = vmatpush1.msra.mxu0 %v543
        %545 = vmatprep.subr.mxu0 0.0
        %v546 = vand.u32 %v173, 4294901760
        %547 = vmatpush1.msra.mxu0 %v546
        %548 = vmatprep.subr.mxu0 0.0
        %v549 = vand.u32 %v174, 4294901760
        %550 = vmatpush1.msra.mxu0 %v549
        %551 = vmatprep.subr.mxu0 0.0
        %v552 = vand.u32 %v175, 4294901760
        %553 = vmatpush1.msra.mxu0 %v552
        %554 = vmatprep.subr.mxu0 0.0
        %v555 = vand.u32 %v176, 4294901760
        %556 = vmatpush1.msra.mxu0 %v555
        %557 = vmatprep.subr.mxu0 0.0
        %v558 = vand.u32 %v177, 4294901760
        %559 = vmatpush1.msra.mxu0 %v558
        %560 = vmatprep.subr.mxu0 0.0
        %v561 = vand.u32 %v178, 4294901760
        %562 = vmatpush1.msra.mxu0 %v561
        %563 = vmatprep.subr.mxu0 0.0
        %v564 = vand.u32 %v179, 4294901760
        %565 = vmatpush1.msra.mxu0 %v564
        %566 = vmatprep.subr.mxu0 0.0
        %v567 = vand.u32 %v180, 4294901760
        %568 = vmatpush1.msra.mxu0 %v567
        %569 = vmatprep.subr.mxu0 0.0
        %v570 = vand.u32 %v181, 4294901760
        %571 = vmatpush1.msra.mxu0 %v570
        %572 = vmatprep.subr.mxu0 0.0
        %v573 = vand.u32 %v182, 4294901760
        %574 = vmatpush1.msra.mxu0 %v573
        %575 = vmatprep.subr.mxu0 0.0
        %v576 = vand.u32 %v183, 4294901760
        %577 = vmatpush1.msra.mxu0 %v576
        %578 = vmatprep.subr.mxu0 0.0
        %579 = vmatpush1.msra.mxu0 0.0
        %580 = vmatprep.subr.mxu0 0.0
        %581 = vmatpush1.msra.mxu0 0.0
        %582 = vmatprep.subr.mxu0 0.0
        %583 = vmatpush1.msra.mxu0 0.0
        %584 = vmatprep.subr.mxu0 0.0
        %585 = vmatpush1.msra.mxu0 0.0
        %586 = vmatprep.subr.mxu0 0.0
        %587 = vmatpush1.msra.mxu0 0.0
        %588 = vmatprep.subr.mxu0 0.0
        %589 = vmatpush1.msra.mxu0 0.0
        %590 = vmatprep.subr.mxu0 0.0
        %591 = vmatpush1.msra.mxu0 0.0
        %592 = vmatprep.subr.mxu0 0.0
        %593 = vmatpush1.msra.mxu0 0.0
        %594 = vmatprep.subr.mxu0 0.0
        %595 = vmatpush1.msra.mxu0 0.0
        %596 = vmatprep.subr.mxu0 0.0
        %597 = vmatpush1.msra.mxu0 0.0
        %598 = vmatprep.subr.mxu0 0.0
        %599 = vmatpush1.msra.mxu0 0.0
        %600 = vmatprep.subr.mxu0 0.0
        %601 = vmatpush1.msra.mxu0 0.0
        %602 = vmatprep.subr.mxu0 0.0
        %603 = vmatpush1.msra.mxu0 0.0
        %604 = vmatprep.subr.mxu0 0.0
        %605 = vmatpush1.msra.mxu0 0.0
        %606 = vmatprep.subr.mxu0 0.0
        %607 = vmatpush1.msra.mxu0 0.0
        %608 = vmatprep.subr.mxu0 0.0
        %609 = vmatpush1.msra.mxu0 0.0
        %610 = vmatprep.mubr.f32.mxu0 0.0
        %v611 = vand.u32 %v167, 4294901760
        %v612 = vsub.f32 %v167, %v611
        %v613 = vand.u32 %v612, 4294901760
        %614 = vmatmul.mubr.f32.gmra.mrb[0].mxu0 %v613
        %v615 = vpop.f32.mrb[0].mxu0
        %v616 = vadd.f32 %v527, %v615
        %v617 = vpop.f32.mrb[0].mxu0
        %618 = vdwg.mxu0
        %619 = vmatprep.subr.mxu0 0.0
        %v620 = vand.u32 %v168, 4294901760
        %v621 = vsub.f32 %v168, %v620
        %v622 = vand.u32 %v621, 4294901760
        %623 = vmatpush1.msra.mxu0 %v622
        %624 = vmatprep.subr.mxu0 0.0
        %v625 = vand.u32 %v169, 4294901760
        %v626 = vsub.f32 %v169, %v625
        %v627 = vand.u32 %v626, 4294901760
        %628 = vmatpush1.msra.mxu0 %v627
        %629 = vmatprep.subr.mxu0 0.0
        %v630 = vand.u32 %v170, 4294901760
        %v631 = vsub.f32 %v170, %v630
        %v632 = vand.u32 %v631, 4294901760
        %633 = vmatpush1.msra.mxu0 %v632
        %634 = vmatprep.subr.mxu0 0.0
        %v635 = vand.u32 %v171, 4294901760
        %v636 = vsub.f32 %v171, %v635
        %v637 = vand.u32 %v636, 4294901760
        %638 = vmatpush1.msra.mxu0 %v637
        %639 = vmatprep.subr.mxu0 0.0
        %v640 = vand.u32 %v172, 4294901760
        %v641 = vsub.f32 %v172, %v640
        %v642 = vand.u32 %v641, 4294901760
        %643 = vmatpush1.msra.mxu0 %v642
        %644 = vmatprep.subr.mxu0 0.0
        %v645 = vand.u32 %v173, 4294901760
        %v646 = vsub.f32 %v173, %v645
        %v647 = vand.u32 %v646, 4294901760
        %648 = vmatpush1.msra.mxu0 %v647
        %649 = vmatprep.subr.mxu0 0.0
        %v650 = vand.u32 %v174, 4294901760
        %v651 = vsub.f32 %v174, %v650
        %v652 = vand.u32 %v651, 4294901760
        %653 = vmatpush1.msra.mxu0 %v652
        %654 = vmatprep.subr.mxu0 0.0
        %v655 = vand.u32 %v175, 4294901760
        %v656 = vsub.f32 %v175, %v655
        %v657 = vand.u32 %v656, 4294901760
        %658 = vmatpush1.msra.mxu0 %v657
        %659 = vmatprep.subr.mxu0 0.0
        %v660 = vand.u32 %v176, 4294901760
        %v661 = vsub.f32 %v176, %v660
        %v662 = vand.u32 %v661, 4294901760
        %663 = vmatpush1.msra.mxu0 %v662
        %664 = vmatprep.subr.mxu0 0.0
        %v665 = vand.u32 %v177, 4294901760
        %v666 = vsub.f32 %v177, %v665
        %v667 = vand.u32 %v666, 4294901760
        %668 = vmatpush1.msra.mxu0 %v667
        %669 = vmatprep.subr.mxu0 0.0
        %v670 = vand.u32 %v178, 4294901760
        %v671 = vsub.f32 %v178, %v670
        %v672 = vand.u32 %v671, 4294901760
        %673 = vmatpush1.msra.mxu0 %v672
        %674 = vmatprep.subr.mxu0 0.0
        %v675 = vand.u32 %v179, 4294901760
        %v676 = vsub.f32 %v179, %v675
        %v677 = vand.u32 %v676, 4294901760
        %678 = vmatpush1.msra.mxu0 %v677
        %679 = vmatprep.subr.mxu0 0.0
        %v680 = vand.u32 %v180, 4294901760
        %v681 = vsub.f32 %v180, %v680
        %v682 = vand.u32 %v681, 4294901760
        %683 = vmatpush1.msra.mxu0 %v682
        %684 = vmatprep.subr.mxu0 0.0
        %v685 = vand.u32 %v181, 4294901760
        %v686 = vsub.f32 %v181, %v685
        %v687 = vand.u32 %v686, 4294901760
        %688 = vmatpush1.msra.mxu0 %v687
        %689 = vmatprep.subr.mxu0 0.0
        %v690 = vand.u32 %v182, 4294901760
        %v691 = vsub.f32 %v182, %v690
        %v692 = vand.u32 %v691, 4294901760
        %693 = vmatpush1.msra.mxu0 %v692
        %694 = vmatprep.subr.mxu0 0.0
        %v695 = vand.u32 %v183, 4294901760
        %v696 = vsub.f32 %v183, %v695
        %v697 = vand.u32 %v696, 4294901760
        %698 = vmatpush1.msra.mxu0 %v697
        %699 = vmatprep.subr.mxu0 0.0
        %700 = vmatpush1.msra.mxu0 0.0
        %701 = vmatprep.subr.mxu0 0.0
        %702 = vmatpush1.msra.mxu0 0.0
        %703 = vmatprep.subr.mxu0 0.0
        %704 = vmatpush1.msra.mxu0 0.0
        %705 = vmatprep.subr.mxu0 0.0
        %706 = vmatpush1.msra.mxu0 0.0
        %707 = vmatprep.subr.mxu0 0.0
        %708 = vmatpush1.msra.mxu0 0.0
        %709 = vmatprep.subr.mxu0 0.0
        %710 = vmatpush1.msra.mxu0 0.0
        %711 = vmatprep.subr.mxu0 0.0
        %712 = vmatpush1.msra.mxu0 0.0
        %713 = vmatprep.subr.mxu0 0.0
        %714 = vmatpush1.msra.mxu0 0.0
        %715 = vmatprep.subr.mxu0 0.0
        %716 = vmatpush1.msra.mxu0 0.0
        %717 = vmatprep.subr.mxu0 0.0
        %718 = vmatpush1.msra.mxu0 0.0
        %719 = vmatprep.subr.mxu0 0.0
        %720 = vmatpush1.msra.mxu0 0.0
        %721 = vmatprep.subr.mxu0 0.0
        %722 = vmatpush1.msra.mxu0 0.0
        %723 = vmatprep.subr.mxu0 0.0
        %724 = vmatpush1.msra.mxu0 0.0
        %725 = vmatprep.subr.mxu0 0.0
        %726 = vmatpush1.msra.mxu0 0.0
        %727 = vmatprep.subr.mxu0 0.0
        %728 = vmatpush1.msra.mxu0 0.0
        %729 = vmatprep.subr.mxu0 0.0
        %730 = vmatpush1.msra.mxu0 0.0
        %731 = vmatprep.mubr.f32.mxu0 0.0
        %v732 = vand.u32 %v167, 4294901760
        %733 = vmatmul.mubr.f32.gmra.mrb[0].mxu0 %v732
        %v734 = vpop.f32.mrb[0].mxu0
        %v735 = vadd.f32 %v616, %v734
        %v736 = vpop.f32.mrb[0].mxu0
        %737 = vdwg.mxu0
        %738 = vmatprep.subr.mxu0 0.0
        %v739 = vand.u32 %v168, 4294901760
        %740 = vmatpush1.msra.mxu0 %v739
        %741 = vmatprep.subr.mxu0 0.0
        %v742 = vand.u32 %v169, 4294901760
        %743 = vmatpush1.msra.mxu0 %v742
        %744 = vmatprep.subr.mxu0 0.0
        %v745 = vand.u32 %v170, 4294901760
        %746 = vmatpush1.msra.mxu0 %v745
        %747 = vmatprep.subr.mxu0 0.0
        %v748 = vand.u32 %v171, 4294901760
        %749 = vmatpush1.msra.mxu0 %v748
        %750 = vmatprep.subr.mxu0 0.0
        %v751 = vand.u32 %v172, 4294901760
        %752 = vmatpush1.msra.mxu0 %v751
        %753 = vmatprep.subr.mxu0 0.0
        %v754 = vand.u32 %v173, 4294901760
        %755 = vmatpush1.msra.mxu0 %v754
        %756 = vmatprep.subr.mxu0 0.0
        %v757 = vand.u32 %v174, 4294901760
        %758 = vmatpush1.msra.mxu0 %v757
        %759 = vmatprep.subr.mxu0 0.0
        %v760 = vand.u32 %v175, 4294901760
        %761 = vmatpush1.msra.mxu0 %v760
        %762 = vmatprep.subr.mxu0 0.0
        %v763 = vand.u32 %v176, 4294901760
        %764 = vmatpush1.msra.mxu0 %v763
        %765 = vmatprep.subr.mxu0 0.0
        %v766 = vand.u32 %v177, 4294901760
        %767 = vmatpush1.msra.mxu0 %v766
        %768 = vmatprep.subr.mxu0 0.0
        %v769 = vand.u32 %v178, 4294901760
        %770 = vmatpush1.msra.mxu0 %v769
        %771 = vmatprep.subr.mxu0 0.0
        %v772 = vand.u32 %v179, 4294901760
        %773 = vmatpush1.msra.mxu0 %v772
        %774 = vmatprep.subr.mxu0 0.0
        %v775 = vand.u32 %v180, 4294901760
        %776 = vmatpush1.msra.mxu0 %v775
        %777 = vmatprep.subr.mxu0 0.0
        %v778 = vand.u32 %v181, 4294901760
        %779 = vmatpush1.msra.mxu0 %v778
        %780 = vmatprep.subr.mxu0 0.0
        %v781 = vand.u32 %v182, 4294901760
        %782 = vmatpush1.msra.mxu0 %v781
        %783 = vmatprep.subr.mxu0 0.0
        %v784 = vand.u32 %v183, 4294901760
        %785 = vmatpush1.msra.mxu0 %v784
        %786 = vmatprep.subr.mxu0 0.0
        %787 = vmatpush1.msra.mxu0 0.0
        %788 = vmatprep.subr.mxu0 0.0
        %789 = vmatpush1.msra.mxu0 0.0
        %790 = vmatprep.subr.mxu0 0.0
        %791 = vmatpush1.msra.mxu0 0.0
        %792 = vmatprep.subr.mxu0 0.0
        %793 = vmatpush1.msra.mxu0 0.0
        %794 = vmatprep.subr.mxu0 0.0
        %795 = vmatpush1.msra.mxu0 0.0
        %796 = vmatprep.subr.mxu0 0.0
        %797 = vmatpush1.msra.mxu0 0.0
        %798 = vmatprep.subr.mxu0 0.0
        %799 = vmatpush1.msra.mxu0 0.0
        %800 = vmatprep.subr.mxu0 0.0
        %801 = vmatpush1.msra.mxu0 0.0
        %802 = vmatprep.subr.mxu0 0.0
        %803 = vmatpush1.msra.mxu0 0.0
        %804 = vmatprep.subr.mxu0 0.0
        %805 = vmatpush1.msra.mxu0 0.0
        %806 = vmatprep.subr.mxu0 0.0
        %807 = vmatpush1.msra.mxu0 0.0
        %808 = vmatprep.subr.mxu0 0.0
        %809 = vmatpush1.msra.mxu0 0.0
        %810 = vmatprep.subr.mxu0 0.0
        %811 = vmatpush1.msra.mxu0 0.0
        %812 = vmatprep.subr.mxu0 0.0
        %813 = vmatpush1.msra.mxu0 0.0
        %814 = vmatprep.subr.mxu0 0.0
        %815 = vmatpush1.msra.mxu0 0.0
        %816 = vmatprep.subr.mxu0 0.0
        %817 = vmatpush1.msra.mxu0 0.0
        %818 = vmatprep.mubr.f32.mxu0 0.0
        %v819 = vand.u32 %v167, 4294901760
        %820 = vmatmul.mubr.f32.gmra.mrb[0].mxu0 %v819
        %v821 = vpop.f32.mrb[0].mxu0
        %v822 = vadd.f32 %v735, %v821
        %v823 = vpop.f32.mrb[0].mxu0
        %824 = vdwg.mxu0
        %v825 = vmax.f32 %v822, 1e-24
        %v826 = vrsqrt.pop %v825
        %v827 = vld [vmem:[%s2] sm:$0xf]
        %vm828 = vcmask 31744
        %v830 = vsel %vm828, %v826, 0
        %vm832 = vcmask 1043456
        %v834 = vsel %vm832, %v827, 0
        %836 = vmatprep.subr.mxu0 0.0
        %v837 = vand.u32 %v834, 4294901760
        %838 = vmatpush1.msra.mxu0 %v837
        %839 = vmatprep.subr.mxu0 0.0
        %840 = vmatpush1.msra.mxu0 0.0
        %841 = vmatprep.subr.mxu0 0.0
        %842 = vmatpush1.msra.mxu0 0.0
        %843 = vmatprep.subr.mxu0 0.0
        %844 = vmatpush1.msra.mxu0 0.0
        %845 = vmatprep.subr.mxu0 0.0
        %846 = vmatpush1.msra.mxu0 0.0
        %847 = vmatprep.subr.mxu0 0.0
        %848 = vmatpush1.msra.mxu0 0.0
        %849 = vmatprep.subr.mxu0 0.0
        %850 = vmatpush1.msra.mxu0 0.0
        %851 = vmatprep.subr.mxu0 0.0
        %852 = vmatpush1.msra.mxu0 0.0
        %853 = vmatprep.subr.mxu0 0.0
        %854 = vmatpush1.msra.mxu0 0.0
        %855 = vmatprep.subr.mxu0 0.0
        %856 = vmatpush1.msra.mxu0 0.0
        %857 = vmatprep.subr.mxu0 0.0
        %858 = vmatpush1.msra.mxu0 0.0
        %859 = vmatprep.subr.mxu0 0.0
        %860 = vmatpush1.msra.mxu0 0.0
        %861 = vmatprep.subr.mxu0 0.0
        %862 = vmatpush1.msra.mxu0 0.0
        %863 = vmatprep.subr.mxu0 0.0
        %864 = vmatpush1.msra.mxu0 0.0
        %865 = vmatprep.subr.mxu0 0.0
        %866 = vmatpush1.msra.mxu0 0.0
        %867 = vmatprep.subr.mxu0 0.0
        %868 = vmatpush1.msra.mxu0 0.0
        %869 = vmatprep.subr.mxu0 0.0
        %870 = vmatpush1.msra.mxu0 0.0
        %871 = vmatprep.subr.mxu0 0.0
        %872 = vmatpush1.msra.mxu0 0.0
        %873 = vmatprep.subr.mxu0 0.0
        %874 = vmatpush1.msra.mxu0 0.0
        %875 = vmatprep.subr.mxu0 0.0
        %876 = vmatpush1.msra.mxu0 0.0
        %877 = vmatprep.subr.mxu0 0.0
        %878 = vmatpush1.msra.mxu0 0.0
        %879 = vmatprep.subr.mxu0 0.0
        %880 = vmatpush1.msra.mxu0 0.0
        %881 = vmatprep.subr.mxu0 0.0
        %882 = vmatpush1.msra.mxu0 0.0
        %883 = vmatprep.subr.mxu0 0.0
        %884 = vmatpush1.msra.mxu0 0.0
        %885 = vmatprep.subr.mxu0 0.0
        %886 = vmatpush1.msra.mxu0 0.0
        %887 = vmatprep.subr.mxu0 0.0
        %888 = vmatpush1.msra.mxu0 0.0
        %889 = vmatprep.subr.mxu0 0.0
        %890 = vmatpush1.msra.mxu0 0.0
        %891 = vmatprep.subr.mxu0 0.0
        %892 = vmatpush1.msra.mxu0 0.0
        %893 = vmatprep.subr.mxu0 0.0
        %894 = vmatpush1.msra.mxu0 0.0
        %895 = vmatprep.subr.mxu0 0.0
        %896 = vmatpush1.msra.mxu0 0.0
        %897 = vmatprep.subr.mxu0 0.0
        %898 = vmatpush1.msra.mxu0 0.0
        %899 = vmatprep.subr.mxu0 0.0
        %900 = vmatpush1.msra.mxu0 0.0
        %901 = vmatprep.mubr.f32.mxu0 0.0
        %v902 = vand.u32 %v830, 4294901760
        %v903 = vsub.f32 %v830, %v902
        %v904 = vand.u32 %v903, 4294901760
        %v905 = vsub.f32 %v903, %v904
        %v906 = vand.u32 %v905, 4294901760
        %907 = vmatmul.mubr.f32.gmra.mrb[0].mxu0 %v906
        %v908 = vpop.f32.mrb[0].mxu0
        %v909 = vadd.f32 0.0, %v908
        %v910 = vpop.f32.mrb[0].mxu0
        %911 = vdwg.mxu0
        %912 = vmatprep.subr.mxu0 0.0
        %v913 = vand.u32 %v834, 4294901760
        %v914 = vsub.f32 %v834, %v913
        %v915 = vand.u32 %v914, 4294901760
        %v916 = vsub.f32 %v914, %v915
        %v917 = vand.u32 %v916, 4294901760
        %918 = vmatpush1.msra.mxu0 %v917
        %919 = vmatprep.subr.mxu0 0.0
        %920 = vmatpush1.msra.mxu0 0.0
        %921 = vmatprep.subr.mxu0 0.0
        %922 = vmatpush1.msra.mxu0 0.0
        %923 = vmatprep.subr.mxu0 0.0
        %924 = vmatpush1.msra.mxu0 0.0
        %925 = vmatprep.subr.mxu0 0.0
        %926 = vmatpush1.msra.mxu0 0.0
        %927 = vmatprep.subr.mxu0 0.0
        %928 = vmatpush1.msra.mxu0 0.0
        %929 = vmatprep.subr.mxu0 0.0
        %930 = vmatpush1.msra.mxu0 0.0
        %931 = vmatprep.subr.mxu0 0.0
        %932 = vmatpush1.msra.mxu0 0.0
        %933 = vmatprep.subr.mxu0 0.0
        %934 = vmatpush1.msra.mxu0 0.0
        %935 = vmatprep.subr.mxu0 0.0
        %936 = vmatpush1.msra.mxu0 0.0
        %937 = vmatprep.subr.mxu0 0.0
        %938 = vmatpush1.msra.mxu0 0.0
        %939 = vmatprep.subr.mxu0 0.0
        %940 = vmatpush1.msra.mxu0 0.0
        %941 = vmatprep.subr.mxu0 0.0
        %942 = vmatpush1.msra.mxu0 0.0
        %943 = vmatprep.subr.mxu0 0.0
        %944 = vmatpush1.msra.mxu0 0.0
        %945 = vmatprep.subr.mxu0 0.0
        %946 = vmatpush1.msra.mxu0 0.0
        %947 = vmatprep.subr.mxu0 0.0
        %948 = vmatpush1.msra.mxu0 0.0
        %949 = vmatprep.subr.mxu0 0.0
        %950 = vmatpush1.msra.mxu0 0.0
        %951 = vmatprep.subr.mxu0 0.0
        %952 = vmatpush1.msra.mxu0 0.0
        %953 = vmatprep.subr.mxu0 0.0
        %954 = vmatpush1.msra.mxu0 0.0
        %955 = vmatprep.subr.mxu0 0.0
        %956 = vmatpush1.msra.mxu0 0.0
        %957 = vmatprep.subr.mxu0 0.0
        %958 = vmatpush1.msra.mxu0 0.0
        %959 = vmatprep.subr.mxu0 0.0
        %960 = vmatpush1.msra.mxu0 0.0
        %961 = vmatprep.subr.mxu0 0.0
        %962 = vmatpush1.msra.mxu0 0.0
        %963 = vmatprep.subr.mxu0 0.0
        %964 = vmatpush1.msra.mxu0 0.0
        %965 = vmatprep.subr.mxu0 0.0
        %966 = vmatpush1.msra.mxu0 0.0
        %967 = vmatprep.subr.mxu0 0.0
        %968 = vmatpush1.msra.mxu0 0.0
        %969 = vmatprep.subr.mxu0 0.0
        %970 = vmatpush1.msra.mxu0 0.0
        %971 = vmatprep.subr.mxu0 0.0
        %972 = vmatpush1.msra.mxu0 0.0
        %973 = vmatprep.subr.mxu0 0.0
        %974 = vmatpush1.msra.mxu0 0.0
        %975 = vmatprep.subr.mxu0 0.0
        %976 = vmatpush1.msra.mxu0 0.0
        %977 = vmatprep.subr.mxu0 0.0
        %978 = vmatpush1.msra.mxu0 0.0
        %979 = vmatprep.subr.mxu0 0.0
        %980 = vmatpush1.msra.mxu0 0.0
        %981 = vmatprep.mubr.f32.mxu0 0.0
        %v982 = vand.u32 %v830, 4294901760
        %983 = vmatmul.mubr.f32.gmra.mrb[0].mxu0 %v982
        %v984 = vpop.f32.mrb[0].mxu0
        %v985 = vadd.f32 %v909, %v984
        %v986 = vpop.f32.mrb[0].mxu0
        %987 = vdwg.mxu0
        %988 = vmatprep.subr.mxu0 0.0
        %v989 = vand.u32 %v834, 4294901760
        %v990 = vsub.f32 %v834, %v989
        %991 = vmatpush1.msra.mxu0 %v990
        %992 = vmatprep.subr.mxu0 0.0
        %993 = vmatpush1.msra.mxu0 0.0
        %994 = vmatprep.subr.mxu0 0.0
        %995 = vmatpush1.msra.mxu0 0.0
        %996 = vmatprep.subr.mxu0 0.0
        %997 = vmatpush1.msra.mxu0 0.0
        %998 = vmatprep.subr.mxu0 0.0
        %999 = vmatpush1.msra.mxu0 0.0
        %1000 = vmatprep.subr.mxu0 0.0
        %1001 = vmatpush1.msra.mxu0 0.0
        %1002 = vmatprep.subr.mxu0 0.0
        %1003 = vmatpush1.msra.mxu0 0.0
        %1004 = vmatprep.subr.mxu0 0.0
        %1005 = vmatpush1.msra.mxu0 0.0
        %1006 = vmatprep.subr.mxu0 0.0
        %1007 = vmatpush1.msra.mxu0 0.0
        %1008 = vmatprep.subr.mxu0 0.0
        %1009 = vmatpush1.msra.mxu0 0.0
        %1010 = vmatprep.subr.mxu0 0.0
        %1011 = vmatpush1.msra.mxu0 0.0
        %1012 = vmatprep.subr.mxu0 0.0
        %1013 = vmatpush1.msra.mxu0 0.0
        %1014 = vmatprep.subr.mxu0 0.0
        %1015 = vmatpush1.msra.mxu0 0.0
        %1016 = vmatprep.subr.mxu0 0.0
        %1017 = vmatpush1.msra.mxu0 0.0
        %1018 = vmatprep.subr.mxu0 0.0
        %1019 = vmatpush1.msra.mxu0 0.0
        %1020 = vmatprep.subr.mxu0 0.0
        %1021 = vmatpush1.msra.mxu0 0.0
        %1022 = vmatprep.subr.mxu0 0.0
        %1023 = vmatpush1.msra.mxu0 0.0
        %1024 = vmatprep.subr.mxu0 0.0
        %1025 = vmatpush1.msra.mxu0 0.0
        %1026 = vmatprep.subr.mxu0 0.0
        %1027 = vmatpush1.msra.mxu0 0.0
        %1028 = vmatprep.subr.mxu0 0.0
        %1029 = vmatpush1.msra.mxu0 0.0
        %1030 = vmatprep.subr.mxu0 0.0
        %1031 = vmatpush1.msra.mxu0 0.0
        %1032 = vmatprep.subr.mxu0 0.0
        %1033 = vmatpush1.msra.mxu0 0.0
        %1034 = vmatprep.subr.mxu0 0.0
        %1035 = vmatpush1.msra.mxu0 0.0
        %1036 = vmatprep.subr.mxu0 0.0
        %1037 = vmatpush1.msra.mxu0 0.0
        %1038 = vmatprep.subr.mxu0 0.0
        %1039 = vmatpush1.msra.mxu0 0.0
        %1040 = vmatprep.subr.mxu0 0.0
        %1041 = vmatpush1.msra.mxu0 0.0
        %1042 = vmatprep.subr.mxu0 0.0
        %1043 = vmatpush1.msra.mxu0 0.0
        %1044 = vmatprep.subr.mxu0 0.0
        %1045 = vmatpush1.msra.mxu0 0.0
        %1046 = vmatprep.subr.mxu0 0.0
        %1047 = vmatpush1.msra.mxu0 0.0
        %1048 = vmatprep.subr.mxu0 0.0
        %1049 = vmatpush1.msra.mxu0 0.0
        %1050 = vmatprep.subr.mxu0 0.0
        %1051 = vmatpush1.msra.mxu0 0.0
        %1052 = vmatprep.subr.mxu0 0.0
        %1053 = vmatpush1.msra.mxu0 0.0
        %1054 = vmatprep.mubr.f32.mxu0 0.0
        %v1055 = vand.u32 %v830, 4294901760
        %v1056 = vsub.f32 %v830, %v1055
        %1057 = vmatmul.mubr.f32.gmra.mrb[0].mxu0 %v1056
        %v1058 = vpop.f32.mrb[0].mxu0
        %v1059 = vadd.f32 %v985, %v1058
        %v1060 = vpop.f32.mrb[0].mxu0
        %1061 = vdwg.mxu0
        %1062 = vmatprep.subr.mxu0 0.0
        %v1063 = vand.u32 %v834, 4294901760
        %1064 = vmatpush1.msra.mxu0 %v1063
        %1065 = vmatprep.subr.mxu0 0.0
        %1066 = vmatpush1.msra.mxu0 0.0
        %1067 = vmatprep.subr.mxu0 0.0
        %1068 = vmatpush1.msra.mxu0 0.0
        %1069 = vmatprep.subr.mxu0 0.0
        %1070 = vmatpush1.msra.mxu0 0.0
        %1071 = vmatprep.subr.mxu0 0.0
        %1072 = vmatpush1.msra.mxu0 0.0
        %1073 = vmatprep.subr.mxu0 0.0
        %1074 = vmatpush1.msra.mxu0 0.0
        %1075 = vmatprep.subr.mxu0 0.0
        %1076 = vmatpush1.msra.mxu0 0.0
        %1077 = vmatprep.subr.mxu0 0.0
        %1078 = vmatpush1.msra.mxu0 0.0
        %1079 = vmatprep.subr.mxu0 0.0
        %1080 = vmatpush1.msra.mxu0 0.0
        %1081 = vmatprep.subr.mxu0 0.0
        %1082 = vmatpush1.msra.mxu0 0.0
        %1083 = vmatprep.subr.mxu0 0.0
        %1084 = vmatpush1.msra.mxu0 0.0
        %1085 = vmatprep.subr.mxu0 0.0
        %1086 = vmatpush1.msra.mxu0 0.0
        %1087 = vmatprep.subr.mxu0 0.0
        %1088 = vmatpush1.msra.mxu0 0.0
        %1089 = vmatprep.subr.mxu0 0.0
        %1090 = vmatpush1.msra.mxu0 0.0
        %1091 = vmatprep.subr.mxu0 0.0
        %1092 = vmatpush1.msra.mxu0 0.0
        %1093 = vmatprep.subr.mxu0 0.0
        %1094 = vmatpush1.msra.mxu0 0.0
        %1095 = vmatprep.subr.mxu0 0.0
        %1096 = vmatpush1.msra.mxu0 0.0
        %1097 = vmatprep.subr.mxu0 0.0
        %1098 = vmatpush1.msra.mxu0 0.0
        %1099 = vmatprep.subr.mxu0 0.0
        %1100 = vmatpush1.msra.mxu0 0.0
        %1101 = vmatprep.subr.mxu0 0.0
        %1102 = vmatpush1.msra.mxu0 0.0
        %1103 = vmatprep.subr.mxu0 0.0
        %1104 = vmatpush1.msra.mxu0 0.0
        %1105 = vmatprep.subr.mxu0 0.0
        %1106 = vmatpush1.msra.mxu0 0.0
        %1107 = vmatprep.subr.mxu0 0.0
        %1108 = vmatpush1.msra.mxu0 0.0
        %1109 = vmatprep.subr.mxu0 0.0
        %1110 = vmatpush1.msra.mxu0 0.0
        %1111 = vmatprep.subr.mxu0 0.0
        %1112 = vmatpush1.msra.mxu0 0.0
        %1113 = vmatprep.subr.mxu0 0.0
        %1114 = vmatpush1.msra.mxu0 0.0
        %1115 = vmatprep.subr.mxu0 0.0
        %1116 = vmatpush1.msra.mxu0 0.0
        %1117 = vmatprep.subr.mxu0 0.0
        %1118 = vmatpush1.msra.mxu0 0.0
        %1119 = vmatprep.subr.mxu0 0.0
        %1120 = vmatpush1.msra.mxu0 0.0
        %1121 = vmatprep.subr.mxu0 0.0
        %1122 = vmatpush1.msra.mxu0 0.0
        %1123 = vmatprep.subr.mxu0 0.0
        %1124 = vmatpush1.msra.mxu0 0.0
        %1125 = vmatprep.subr.mxu0 0.0
        %1126 = vmatpush1.msra.mxu0 0.0
        %1127 = vmatprep.mubr.f32.mxu0 0.0
        %v1128 = vand.u32 %v830, 4294901760
        %v1129 = vsub.f32 %v830, %v1128
        %v1130 = vand.u32 %v1129, 4294901760
        %1131 = vmatmul.mubr.f32.gmra.mrb[0].mxu0 %v1130
        %v1132 = vpop.f32.mrb[0].mxu0
        %v1133 = vadd.f32 %v1059, %v1132
        %v1134 = vpop.f32.mrb[0].mxu0
        %1135 = vdwg.mxu0
        %1136 = vmatprep.subr.mxu0 0.0
        %v1137 = vand.u32 %v834, 4294901760
        %v1138 = vsub.f32 %v834, %v1137
        %v1139 = vand.u32 %v1138, 4294901760
        %1140 = vmatpush1.msra.mxu0 %v1139
        %1141 = vmatprep.subr.mxu0 0.0
        %1142 = vmatpush1.msra.mxu0 0.0
        %1143 = vmatprep.subr.mxu0 0.0
        %1144 = vmatpush1.msra.mxu0 0.0
        %1145 = vmatprep.subr.mxu0 0.0
        %1146 = vmatpush1.msra.mxu0 0.0
        %1147 = vmatprep.subr.mxu0 0.0
        %1148 = vmatpush1.msra.mxu0 0.0
        %1149 = vmatprep.subr.mxu0 0.0
        %1150 = vmatpush1.msra.mxu0 0.0
        %1151 = vmatprep.subr.mxu0 0.0
        %1152 = vmatpush1.msra.mxu0 0.0
        %1153 = vmatprep.subr.mxu0 0.0
        %1154 = vmatpush1.msra.mxu0 0.0
        %1155 = vmatprep.subr.mxu0 0.0
        %1156 = vmatpush1.msra.mxu0 0.0
        %1157 = vmatprep.subr.mxu0 0.0
        %1158 = vmatpush1.msra.mxu0 0.0
        %1159 = vmatprep.subr.mxu0 0.0
        %1160 = vmatpush1.msra.mxu0 0.0
        %1161 = vmatprep.subr.mxu0 0.0
        %1162 = vmatpush1.msra.mxu0 0.0
        %1163 = vmatprep.subr.mxu0 0.0
        %1164 = vmatpush1.msra.mxu0 0.0
        %1165 = vmatprep.subr.mxu0 0.0
        %1166 = vmatpush1.msra.mxu0 0.0
        %1167 = vmatprep.subr.mxu0 0.0
        %1168 = vmatpush1.msra.mxu0 0.0
        %1169 = vmatprep.subr.mxu0 0.0
        %1170 = vmatpush1.msra.mxu0 0.0
        %1171 = vmatprep.subr.mxu0 0.0
        %1172 = vmatpush1.msra.mxu0 0.0
        %1173 = vmatprep.subr.mxu0 0.0
        %1174 = vmatpush1.msra.mxu0 0.0
        %1175 = vmatprep.subr.mxu0 0.0
        %1176 = vmatpush1.msra.mxu0 0.0
        %1177 = vmatprep.subr.mxu0 0.0
        %1178 = vmatpush1.msra.mxu0 0.0
        %1179 = vmatprep.subr.mxu0 0.0
        %1180 = vmatpush1.msra.mxu0 0.0
        %1181 = vmatprep.subr.mxu0 0.0
        %1182 = vmatpush1.msra.mxu0 0.0
        %1183 = vmatprep.subr.mxu0 0.0
        %1184 = vmatpush1.msra.mxu0 0.0
        %1185 = vmatprep.subr.mxu0 0.0
        %1186 = vmatpush1.msra.mxu0 0.0
        %1187 = vmatprep.subr.mxu0 0.0
        %1188 = vmatpush1.msra.mxu0 0.0
        %1189 = vmatprep.subr.mxu0 0.0
        %1190 = vmatpush1.msra.mxu0 0.0
        %1191 = vmatprep.subr.mxu0 0.0
        %1192 = vmatpush1.msra.mxu0 0.0
        %1193 = vmatprep.subr.mxu0 0.0
        %1194 = vmatpush1.msra.mxu0 0.0
        %1195 = vmatprep.subr.mxu0 0.0
        %1196 = vmatpush1.msra.mxu0 0.0
        %1197 = vmatprep.subr.mxu0 0.0
        %1198 = vmatpush1.msra.mxu0 0.0
        %1199 = vmatprep.subr.mxu0 0.0
        %1200 = vmatpush1.msra.mxu0 0.0
        %1201 = vmatprep.subr.mxu0 0.0
        %1202 = vmatpush1.msra.mxu0 0.0
        %1203 = vmatprep.mubr.f32.mxu0 0.0
        %v1204 = vand.u32 %v830, 4294901760
        %1205 = vmatmul.mubr.f32.gmra.mrb[0].mxu0 %v1204
        %v1206 = vpop.f32.mrb[0].mxu0
        %v1207 = vadd.f32 %v1133, %v1206
        %v1208 = vpop.f32.mrb[0].mxu0
        %1209 = vdwg.mxu0
        %1210 = vmatprep.subr.mxu0 0.0
        %v1211 = vand.u32 %v834, 4294901760
        %1212 = vmatpush1.msra.mxu0 %v1211
        %1213 = vmatprep.subr.mxu0 0.0
        %1214 = vmatpush1.msra.mxu0 0.0
        %1215 = vmatprep.subr.mxu0 0.0
        %1216 = vmatpush1.msra.mxu0 0.0
        %1217 = vmatprep.subr.mxu0 0.0
        %1218 = vmatpush1.msra.mxu0 0.0
        %1219 = vmatprep.subr.mxu0 0.0
        %1220 = vmatpush1.msra.mxu0 0.0
        %1221 = vmatprep.subr.mxu0 0.0
        %1222 = vmatpush1.msra.mxu0 0.0
        %1223 = vmatprep.subr.mxu0 0.0
        %1224 = vmatpush1.msra.mxu0 0.0
        %1225 = vmatprep.subr.mxu0 0.0
        %1226 = vmatpush1.msra.mxu0 0.0
        %1227 = vmatprep.subr.mxu0 0.0
        %1228 = vmatpush1.msra.mxu0 0.0
        %1229 = vmatprep.subr.mxu0 0.0
        %1230 = vmatpush1.msra.mxu0 0.0
        %1231 = vmatprep.subr.mxu0 0.0
        %1232 = vmatpush1.msra.mxu0 0.0
        %1233 = vmatprep.subr.mxu0 0.0
        %1234 = vmatpush1.msra.mxu0 0.0
        %1235 = vmatprep.subr.mxu0 0.0
        %1236 = vmatpush1.msra.mxu0 0.0
        %1237 = vmatprep.subr.mxu0 0.0
        %1238 = vmatpush1.msra.mxu0 0.0
        %1239 = vmatprep.subr.mxu0 0.0
        %1240 = vmatpush1.msra.mxu0 0.0
        %1241 = vmatprep.subr.mxu0 0.0
        %1242 = vmatpush1.msra.mxu0 0.0
        %1243 = vmatprep.subr.mxu0 0.0
        %1244 = vmatpush1.msra.mxu0 0.0
        %1245 = vmatprep.subr.mxu0 0.0
        %1246 = vmatpush1.msra.mxu0 0.0
        %1247 = vmatprep.subr.mxu0 0.0
        %1248 = vmatpush1.msra.mxu0 0.0
        %1249 = vmatprep.subr.mxu0 0.0
        %1250 = vmatpush1.msra.mxu0 0.0
        %1251 = vmatprep.subr.mxu0 0.0
        %1252 = vmatpush1.msra.mxu0 0.0
        %1253 = vmatprep.subr.mxu0 0.0
        %1254 = vmatpush1.msra.mxu0 0.0
        %1255 = vmatprep.subr.mxu0 0.0
        %1256 = vmatpush1.msra.mxu0 0.0
        %1257 = vmatprep.subr.mxu0 0.0
        %1258 = vmatpush1.msra.mxu0 0.0
        %1259 = vmatprep.subr.mxu0 0.0
        %1260 = vmatpush1.msra.mxu0 0.0
        %1261 = vmatprep.subr.mxu0 0.0
        %1262 = vmatpush1.msra.mxu0 0.0
        %1263 = vmatprep.subr.mxu0 0.0
        %1264 = vmatpush1.msra.mxu0 0.0
        %1265 = vmatprep.subr.mxu0 0.0
        %1266 = vmatpush1.msra.mxu0 0.0
        %1267 = vmatprep.subr.mxu0 0.0
        %1268 = vmatpush1.msra.mxu0 0.0
        %1269 = vmatprep.subr.mxu0 0.0
        %1270 = vmatpush1.msra.mxu0 0.0
        %1271 = vmatprep.subr.mxu0 0.0
        %1272 = vmatpush1.msra.mxu0 0.0
        %1273 = vmatprep.subr.mxu0 0.0
        %1274 = vmatpush1.msra.mxu0 0.0
        %1275 = vmatprep.mubr.f32.mxu0 0.0
        %v1276 = vand.u32 %v830, 4294901760
        %1277 = vmatmul.mubr.f32.gmra.mrb[0].mxu0 %v1276
        %v1278 = vpop.f32.mrb[0].mxu0
        %v1279 = vadd.f32 %v1207, %v1278
        %v1280 = vpop.f32.mrb[0].mxu0
        %1281 = vdwg.mxu0
        %v1282 = vmul.f32 %v166, %v1279
        %1283 = vst [vmem:[%s161] sm:$0xff] %v1282
        %s1284 = sand.u32 %s93, 1
        %s1285 = scalar_lea.sflag [#allocation3], %s1284
        %s1286 = sand.u32 %s93, 1
        %s1287 = smul.addr %s1286, 8
        %s1288 = scalar_lea.vmem [#allocation2], %s1287
        // Predicated region
        $region33: #{tpu_custom_call.1} parent=31 // pred_check
          %p1289 = pneg %p103
        $region34: #{tpu_custom_call.1} parent=31 // pred_check_branch
          %1291 = sbr.rel (%p1289) target = $region36
        $region35: #{tpu_custom_call.1} parent=31 // pred_region
          %s1293 = ssub.s32 128, 128
          %1294 = vsyncadd %s1285, %s1293
          %s1295 = smul.addr %s17, 128
          %s1296 = scalar_lea.hbm %s3, %s1295
          %s1298 = sshll.u32 %s1288, 4
          %s1299 = int_to_ptr.vmem [resolvable:$true] %s1298
          %1301 = dma.vmem_to_hbm [thread:$0]  %s1299, 128, %s1296, %s1285
        $region36: #{tpu_custom_call.1} parent=31 // pred_fallthru
          _
      $region32: #{tpu_custom_call.1} parent=5 // pred_fallthru
        _
      %p1302 = scmp.le.s32.totalorder 2, %s12
      // Predicated region
      $region37: #{tpu_custom_call.1} parent=5 // pred_check
        %p1303 = pneg %p1302
      $region38: #{tpu_custom_call.1} parent=5 // pred_check_branch
        %1305 = sbr.rel (%p1303) target = $region40
      $region39: #{tpu_custom_call.1} parent=5 // pred_region
        %s1306 = ssub.s32 %s12, 2
        // Predicated region
        $region41: #{tpu_custom_call.1} parent=39 // pred_check
          %p1307 = pneg %p109
        $region42: #{tpu_custom_call.1} parent=39 // pred_check_branch
          %1309 = sbr.rel (%p1307) target = $region44
        $region43: #{tpu_custom_call.1} parent=39 // pred_region
          %s1310 = sand.u32 %s94, 1
          %s1311 = scalar_lea.sflag [#allocation3], %s1310
          %s1312 = sand.u32 %s94, 1
          %s1313 = smul.addr %s1312, 8
          %s1314 = scalar_lea.vmem [#allocation2], %s1313
          %1315 = dma.done %s1311, 128
        $region44: #{tpu_custom_call.1} parent=39 // pred_fallthru
          _
      $region40: #{tpu_custom_call.1} parent=5 // pred_fallthru
        _
    $region6: #{tpu_custom_call.1} parent=1 // loop_footer
      %s16 = sadd.s32 1, %s12
    $region7: #{tpu_custom_call.1} parent=1 // loop_footer_branch
      %11 = sbr.rel target = $region3
    $region8: #{tpu_custom_call.1} parent=1 // loop_exit
      _
    %1316 = vsyncpa [#allocation3], 1
    %s1317 = scalar_lea.sflag [#allocation3], 1
    %1318 = vsyncpa %s1317, 1

</llo_original>
